<compile_context>
chip_gen: v7x
topology: tpu7x:2x2x1
jax: 0.10.0
libtpu: 0.0.40
codegen_flags: <defaults>
</compile_context>

<pallas_src>
import functools

import jax
import jax.numpy as jnp
from jax.experimental import pallas as pl
from jax.experimental.pallas import tpu as pltpu

D2 = 256      # attn_linear2 input dim (from the module)
FEAT = 64     # synthetic backbone feature dim
DCLS = 128    # synthetic classifier output dim


def _series_kernel(x_ref, w12_ref, small_ref, out_ref, acc_ref, *,
                   nb, series, channels, feat_dim, d2, hw_tile, rem, inv_hw):
    hw_step = pl.program_id(1)
    last = pl.num_programs(1) - 1
    sc = series * channels

    @pl.when(hw_step == 0)
    def _init():
        acc_ref[...] = jnp.zeros_like(acc_ref)

    # ---- per-step: accumulate raw sums into a lane-dense (nb, sc, 128) f32
    # scratch with plain VPU adds over 128-lane slices of the native-dtype
    # chunk.  The cross-lane reduce + 1/HW scale are deferred to finalize.
    chunk = x_ref[...]                                        # (nb, sc, hw_tile)
    if rem:                                                   # ragged last HW tile
        lane = jax.lax.broadcasted_iota(jnp.int32, (nb, sc, 128), 2)
        limit = jnp.where(hw_step == last, rem, hw_tile)      # valid lanes this step
    acc = acc_ref[...]
    for k in range(hw_tile // 128):
        piece = chunk[:, :, k * 128:(k + 1) * 128].astype(jnp.float32)
        if rem:
            piece = jnp.where(lane < (limit - k * 128), piece, 0.0)
        acc = acc + piece
    acc_ref[...] = acc

    # ---- finalize: tiny MLP -> softmax over series -> weighted feature sum.
    @pl.when(hw_step == last)
    def _finalize():
        small = small_ref[...]
        bnet = small[0:1, :feat_dim]
        b12 = small[1:2, :d2]
        w2row = small[2:3, :d2]
        wnet = small[3:3 + channels, :feat_dim]
        w12 = w12_ref[...]

        # global-average-pool: one XLU lane reduce + one 1/HW multiply.
        pooled_all = jnp.sum(acc_ref[...], axis=-1) * inv_hw          # (nb, sc)

        for b in range(nb):                                           # static, nb <= 8
            pooled = pooled_all[b:b + 1, :].reshape(series, channels)  # (S, C)
            # net linear C -> FEAT on the (otherwise idle) MXU.
            feat = jnp.dot(pooled, wnet,
                           preferred_element_type=jnp.float32) + bnet  # (S, FEAT)
            # classifier -> attn_linear1 folded host-side (exact: no nonlinearity between).
            a1 = jnp.dot(feat, w12, preferred_element_type=jnp.float32) + b12
            a1 = jnp.maximum(a1, 0.0)                                   # (S, D2)
            # attn_linear2 (D2 -> 1) as VPU multiply + lane reduce; its bias is
            # dropped exactly (softmax over series is shift-invariant).
            logits = jnp.sum(a1 * w2row, axis=-1, keepdims=True)        # (S, 1)
            m = jnp.max(logits, axis=0, keepdims=True)
            e = jnp.exp(logits - m)
            attn = e / jnp.sum(e, axis=0, keepdims=True)                # (S, 1)
            out_ref[0, pl.ds(b, 1), :] = jnp.sum(
                feat * attn, axis=0, keepdims=True).astype(out_ref.dtype)


def _choose_tiles(B, sc, HW, itemsize, hw_tile, nb, *,
                  target_bytes=4 << 20, nb_cap=8):
    """Pick hw_tile (lane-aligned) and a batch block nb that divides B."""
    if hw_tile is None:
        hw_tile = min(HW, max(128, target_bytes // (sc * itemsize)))
    hw_tile = max(128, ((hw_tile + 127) // 128) * 128)   # may overrun HW; masked in-kernel
    if nb is None:
        per_b = sc * hw_tile * itemsize
        # keep >= 2 batch blocks when possible so the batch grid axis can still
        # be sharded across TensorCores (v7x megacore).
        want = min(nb_cap, max(1, B // 2), max(1, target_bytes // max(per_b, 1)))
        nb = 1
        for d in range(1, min(B, want) + 1):
            if B % d == 0:
                nb = d
    assert B % nb == 0, "batch block must divide batch"
    return hw_tile, nb


def series_model_forward(x, params, *, hw_tile=None, nb=None):
    """x: (B, S, C, H, W).  Returns (B, FEAT) float32."""
    B, S, C, H, W = x.shape
    HW = H * W
    sc = S * C
    wnet, bnet, wcls, bcls, w1, b1, w2, b2 = params
    feat_dim = wnet.shape[1]
    d2 = w1.shape[1]
    itemsize = jnp.dtype(x.dtype).itemsize
    del b2  # softmax over series is shift-invariant -> attn_linear2 bias is a no-op (exact).

    # Fold classifier -> attn_linear1 (exact: no nonlinearity between them).
    w12 = (wcls @ w1).astype(jnp.float32)                              # (FEAT, D2)
    b12 = (bcls.reshape(1, -1) @ w1 + b1.reshape(1, -1)).reshape(-1)   # (D2,)

    # Pack every tiny operand into one lane-aligned array: one VMEM-resident
    # block / one DMA descriptor instead of several padded (8,128) buffers.
    wpack = ((max(feat_dim, d2) + 127) // 128) * 128
    small = jnp.zeros((3 + C, wpack), jnp.float32)
    small = small.at[0, :feat_dim].set(bnet.reshape(-1))
    small = small.at[1, :d2].set(b12)
    small = small.at[2, :d2].set(w2.reshape(-1))
    small = small.at[3:3 + C, :feat_dim].set(wnet)

    hw_tile, nb = _choose_tiles(B, sc, HW, itemsize, hw_tile, nb)
    n_hw = pl.cdiv(HW, hw_tile)
    rem = HW % hw_tile            # nonzero -> ragged last HW tile, masked in-kernel
    n_bblk = B // nb

    # Stream x in its native dtype: this reshape is metadata-only (no HBM copy),
    # unlike the previous bf16-cast + pad wrapper that tripled HBM traffic.
    x_flat = x.reshape(B, sc, HW)

    kernel = functools.partial(
        _series_kernel, nb=nb, series=S, channels=C, feat_dim=feat_dim, d2=d2,
        hw_tile=hw_tile, rem=rem, inv_hw=1.0 / HW)

    grid_spec = pltpu.PrefetchScalarGridSpec(
        num_scalar_prefetch=0,
        grid=(n_bblk, n_hw),
        in_specs=[
            # TODO(synk): add pipeline_mode=pl.Buffered(3) here only if xprof
            # shows exposed DMA between steps once blocks are >= 1 MiB.
            pl.BlockSpec((nb, sc, hw_tile), lambda b, h: (b, 0, h)),
            pl.BlockSpec((feat_dim, d2), lambda b, h: (0, 0)),   # VMEM-resident
            pl.BlockSpec((3 + C, wpack), lambda b, h: (0, 0)),   # VMEM-resident
        ],
        out_specs=pl.BlockSpec((1, nb, feat_dim), lambda b, h: (b, 0, 0)),
        scratch_shapes=[pltpu.VMEM((nb, sc, 128), jnp.float32)],
    )

    # VMEM budget derived from actual blocks; 48 MiB cap keeps it inside v7x's
    # 64 MiB/TC while the tile chooser targets <= ~4 MiB x blocks everywhere.
    x_block = nb * sc * hw_tile * itemsize
    resident = 4 * (w12.size + small.size + nb * sc * 128 + nb * feat_dim)
    vmem_limit = int(min(max(3 * x_block + 2 * resident + (2 << 20), 16 << 20),
                         48 << 20))

    cost = pl.CostEstimate(
        flops=2 * B * sc * HW + 2 * B * S * (C * feat_dim + feat_dim * d2 + d2),
        transcendentals=B * S,
        bytes_accessed=B * sc * HW * itemsize + 4 * (w12.size + small.size)
        + B * feat_dim * 4,
    )

    out = pl.pallas_call(
        kernel,
        out_shape=jax.ShapeDtypeStruct((n_bblk, nb, feat_dim), jnp.float32),
        grid_spec=grid_spec,
        compiler_params=pltpu.CompilerParams(
            dimension_semantics=("parallel", "arbitrary"),
            vmem_limit_bytes=vmem_limit),
        cost_estimate=cost,
    )(x_flat, w12, small)

    # TODO(synk): when B == 1 on a 2-TensorCore part (v7x), split n_hw into a
    # leading "parallel" sub-axis with per-core partial sums combined in a
    # second pass so both cores share the HBM stream; single-core path kept here.
    return out.reshape(B, feat_dim)


def make_params(key, channels):
    ks = jax.random.split(key, 8)
    scale = 0.05
    wnet = scale * jax.random.normal(ks[0], (channels, FEAT), jnp.float32)
    bnet = scale * jax.random.normal(ks[1], (1, FEAT), jnp.float32)
    wcls = scale * jax.random.normal(ks[2], (FEAT, DCLS), jnp.float32)
    bcls = scale * jax.random.normal(ks[3], (1, DCLS), jnp.float32)
    w1 = scale * jax.random.normal(ks[4], (DCLS, D2), jnp.float32)
    b1 = scale * jax.random.normal(ks[5], (1, D2), jnp.float32)
    w2 = scale * jax.random.normal(ks[6], (D2, 1), jnp.float32)
    b2 = scale * jax.random.normal(ks[7], (1, 1), jnp.float32)
    return (wnet, bnet, wcls, bcls, w1, b1, w2, b2)


def reference_forward(x, params):
    """Pure-JAX f32 reference (un-folded weights, attn bias included)."""
    wnet, bnet, wcls, bcls, w1, b1, w2, b2 = params
    B, S, C, H, W = x.shape
    pooled = jnp.mean(x.astype(jnp.float32).reshape(B * S, C, H * W), axis=-1)
    feat = pooled @ wnet + bnet
    cls = feat @ wcls + bcls
    a1 = jnp.maximum(cls @ w1 + b1, 0.0)
    a2 = a1 @ w2 + b2
    attn = jax.nn.softmax(a2.reshape(B, S, 1), axis=1)
    return jnp.sum(feat.reshape(B, S, -1) * attn, axis=1)


if __name__ == "__main__":
    key = jax.random.PRNGKey(0)
    kx, kp, kx2, kp2 = jax.random.split(key, 4)

    # Config 1: HW divisible by the tile -> multi-step reduction pipeline,
    # two batch blocks on the "parallel" grid axis.
    B, S, C, H, W = 2, 8, 4, 16, 16
    x = jax.random.normal(kx, (B, S, C, H, W), jnp.float32)
    params = make_params(kp, C)
    out = jax.block_until_ready(series_model_forward(x, params, hw_tile=128))
    ref = reference_forward(x, params)
    assert out.shape == (B, FEAT)
    assert jnp.allclose(out, ref, atol=1e-4, rtol=1e-4), "mismatch vs reference (config 1)"

    # Config 2: ragged HW (100 lanes vs 128 tile) exercises the in-kernel mask,
    # and nb=3 exercises multi-batch blocking in the finalize epilogue.
    B2, S2, C2, H2, W2 = 3, 4, 3, 10, 10
    x2 = jax.random.normal(kx2, (B2, S2, C2, H2, W2), jnp.float32)
    params2 = make_params(kp2, C2)
    out2 = jax.block_until_ready(series_model_forward(x2, params2, nb=3))
    ref2 = reference_forward(x2, params2)
    assert out2.shape == (B2, FEAT)
    assert jnp.allclose(out2, ref2, atol=1e-4, rtol=1e-4), "mismatch vs reference (config 2)"

    print("KERNEL_OK")
</pallas_src>

<mosaic_0001>
module attributes {stable_mosaic.version = 11 : i64} {
  func.func @_series_kernel(%arg0: i32, %arg1: i32, %arg2: memref<1x32x128xf32, #tpu.memory_space<vmem>>, %arg3: memref<64x256xf32, #tpu.memory_space<vmem>>, %arg4: memref<7x256xf32, #tpu.memory_space<vmem>>, %arg5: memref<1x1x64xf32, #tpu.memory_space<vmem>>, %arg6: memref<1x32x128xf32, #tpu.memory_space<vmem>>) attributes {dimension_semantics = [#tpu.dimension_semantics<parallel>, #tpu.dimension_semantics<arbitrary>], iteration_bounds = array<i64: 2, 2>, scalar_prefetch = 0 : i64, scratch_operands = 1 : i64, tpu.core_type = #tpu.core_type<tc>, window_params = [{transform_indices = @transform_0, window_bounds = array<i64: 1, 32, 128>}, {pipeline_mode = #tpu.pipeline_mode<synchronous>, transform_indices = @transform_1, window_bounds = array<i64: 64, 256>}, {pipeline_mode = #tpu.pipeline_mode<synchronous>, transform_indices = @transform_2, window_bounds = array<i64: 7, 256>}, {transform_indices = @transform_3, window_bounds = array<i64: 1, 1, 64>}]} {
    %c0_i32 = arith.constant 0 : i32
    %0 = arith.cmpi eq, %arg1, %c0_i32 : i32
    %1 = arith.extui %0 : i1 to i32
    %c0_i32_0 = arith.constant 0 : i32
    %2 = arith.cmpi ne, %1, %c0_i32_0 : i32
    scf.if %2 {
      %cst = arith.constant 0.000000e+00 : f32
      %10 = vector.broadcast %cst : f32 to vector<1x32x128xf32>
      %c0_10 = arith.constant 0 : index
      %c0_11 = arith.constant 0 : index
      %c0_12 = arith.constant 0 : index
      %11 = vector.load %arg6[%c0_10, %c0_11, %c0_12] : memref<1x32x128xf32, #tpu.memory_space<vmem>>, vector<1x32x128xf32>
      tpu.vector_store %arg6[%c0_10, %c0_11, %c0_12], %10 {strides = array<i32>} : memref<1x32x128xf32, #tpu.memory_space<vmem>>, vector<1x32x128xf32>,
    } else {
    }
    %c0 = arith.constant 0 : index
    %c0_1 = arith.constant 0 : index
    %c0_2 = arith.constant 0 : index
    %3 = vector.load %arg2[%c0, %c0_1, %c0_2] : memref<1x32x128xf32, #tpu.memory_space<vmem>>, vector<1x32x128xf32>
    %c0_3 = arith.constant 0 : index
    %c0_4 = arith.constant 0 : index
    %c0_5 = arith.constant 0 : index
    %4 = vector.load %arg6[%c0_3, %c0_4, %c0_5] : memref<1x32x128xf32, #tpu.memory_space<vmem>>, vector<1x32x128xf32>
    %5 = arith.addf %4, %3 : vector<1x32x128xf32>
    %c0_6 = arith.constant 0 : index
    %c0_7 = arith.constant 0 : index
    %c0_8 = arith.constant 0 : index
    %6 = vector.load %arg6[%c0_6, %c0_7, %c0_8] : memref<1x32x128xf32, #tpu.memory_space<vmem>>, vector<1x32x128xf32>
    tpu.vector_store %arg6[%c0_6, %c0_7, %c0_8], %5 {strides = array<i32>} : memref<1x32x128xf32, #tpu.memory_space<vmem>>, vector<1x32x128xf32>,
    %c1_i32 = arith.constant 1 : i32
    %7 = arith.cmpi eq, %arg1, %c1_i32 : i32
    %8 = arith.extui %7 : i1 to i32
    %c0_i32_9 = arith.constant 0 : i32
    %9 = arith.cmpi ne, %8, %c0_i32_9 : i32
    scf.if %9 {
      %c0_10 = arith.constant 0 : index
      %c0_11 = arith.constant 0 : index
      %10 = vector.load %arg4[%c0_10, %c0_11] : memref<7x256xf32, #tpu.memory_space<vmem>>, vector<7x256xf32>
      %11 = vector.extract_strided_slice %10 {offsets = [0, 0], sizes = [1, 64], strides = [1, 1]} : vector<7x256xf32> to vector<1x64xf32>
      %12 = vector.extract_strided_slice %10 {offsets = [1, 0], sizes = [1, 256], strides = [1, 1]} : vector<7x256xf32> to vector<1x256xf32>
      %13 = vector.extract_strided_slice %10 {offsets = [2, 0], sizes = [1, 256], strides = [1, 1]} : vector<7x256xf32> to vector<1x256xf32>
      %14 = vector.extract_strided_slice %10 {offsets = [3, 0], sizes = [4, 64], strides = [1, 1]} : vector<7x256xf32> to vector<4x64xf32>
      %c0_12 = arith.constant 0 : index
      %c0_13 = arith.constant 0 : index
      %15 = vector.load %arg3[%c0_12, %c0_13] : memref<64x256xf32, #tpu.memory_space<vmem>>, vector<64x256xf32>
      %c0_14 = arith.constant 0 : index
      %c0_15 = arith.constant 0 : index
      %c0_16 = arith.constant 0 : index
      %16 = vector.load %arg6[%c0_14, %c0_15, %c0_16] : memref<1x32x128xf32, #tpu.memory_space<vmem>>, vector<1x32x128xf32>
      %cst = arith.constant dense<0.000000e+00> : vector<1x32xf32>
      %17 = vector.multi_reduction <add>, %16, %cst [2] : vector<1x32x128xf32> to vector<1x32xf32>
      %cst_17 = arith.constant 3.906250e-03 : f32
      %18 = vector.broadcast %cst_17 : f32 to vector<1x32xf32>
      %19 = arith.mulf %17, %18 : vector<1x32xf32>
      %20 = vector.shape_cast %19 : vector<1x32xf32> to vector<8x4xf32>
      %cst_18 = arith.constant dense<0.000000e+00> : vector<8x64xf32>
      %21 = tpu.matmul %20, %14, %cst_18 {dimension_numbers = #tpu.dot_dimension_numbers<[1], [0], [0], [1], [0, 0, 1, 1], [], []>} : vector<8x4xf32>, vector<4x64xf32>, vector<8x64xf32> -> vector<8x64xf32>
      %22 = vector.broadcast %11 : vector<1x64xf32> to vector<8x64xf32>
      %23 = arith.addf %21, %22 : vector<8x64xf32>
      %cst_19 = arith.constant dense<0.000000e+00> : vector<8x256xf32>
      %24 = tpu.matmul %23, %15, %cst_19 {dimension_numbers = #tpu.dot_dimension_numbers<[1], [0], [0], [1], [0, 0, 1, 1], [], []>} : vector<8x64xf32>, vector<64x256xf32>, vector<8x256xf32> -> vector<8x256xf32>
      %25 = vector.broadcast %12 : vector<1x256xf32> to vector<8x256xf32>
      %26 = arith.addf %24, %25 : vector<8x256xf32>
      %cst_20 = arith.constant 0.000000e+00 : f32
      %27 = vector.broadcast %cst_20 : f32 to vector<8x256xf32>
      %28 = arith.maximumf %26, %27 : vector<8x256xf32>
      %29 = vector.broadcast %13 : vector<1x256xf32> to vector<8x256xf32>
      %30 = arith.mulf %28, %29 : vector<8x256xf32>
      %cst_21 = arith.constant dense<0.000000e+00> : vector<8xf32>
      %31 = vector.multi_reduction <add>, %30, %cst_21 [1] : vector<8x256xf32> to vector<8xf32>
      %32 = vector.shape_cast %31 : vector<8xf32> to vector<8x1xf32>
      %cst_22 = arith.constant dense<0xFF800000> : vector<1xf32>
      %33 = vector.multi_reduction <maximumf>, %32, %cst_22 [0] : vector<8x1xf32> to vector<1xf32>
      %34 = vector.shape_cast %33 : vector<1xf32> to vector<1x1xf32>
      %35 = vector.broadcast %34 : vector<1x1xf32> to vector<8x1xf32>
      %36 = arith.subf %32, %35 : vector<8x1xf32>
      %37 = math.exp %36 : vector<8x1xf32>
      %cst_23 = arith.constant dense<0.000000e+00> : vector<1xf32>
      %38 = vector.multi_reduction <add>, %37, %cst_23 [0] : vector<8x1xf32> to vector<1xf32>
      %39 = vector.shape_cast %38 : vector<1xf32> to vector<1x1xf32>
      %40 = vector.broadcast %39 : vector<1x1xf32> to vector<8x1xf32>
      %41 = arith.divf %37, %40 : vector<8x1xf32>
      %42 = vector.broadcast %41 : vector<8x1xf32> to vector<8x64xf32>
      %43 = arith.mulf %23, %42 : vector<8x64xf32>
      %cst_24 = arith.constant dense<0.000000e+00> : vector<64xf32>
      %44 = vector.multi_reduction <add>, %43, %cst_24 [0] : vector<8x64xf32> to vector<64xf32>
      %45 = vector.shape_cast %44 : vector<64xf32> to vector<1x64xf32>
      %c0_25 = arith.constant 0 : index
      %c0_26 = arith.constant 0 : index
      %c0_27 = arith.constant 0 : index
      %46 = vector.load %arg5[%c0_25, %c0_26, %c0_27] : memref<1x1x64xf32, #tpu.memory_space<vmem>>, vector<1x1x64xf32>
      %47 = vector.shape_cast %46 : vector<1x1x64xf32> to vector<1x64xf32>
      %48 = vector.shape_cast %45 : vector<1x64xf32> to vector<1x1x64xf32>
      tpu.vector_store %arg5[%c0_25, %c0_26, %c0_27], %48 {strides = array<i32>} : memref<1x1x64xf32, #tpu.memory_space<vmem>>, vector<1x1x64xf32>,
    } else {
    }
    return
  }
  func.func @transform_0(%arg0: i32, %arg1: i32) -> (i32, i32, i32) {
    %c0_i32 = arith.constant 0 : i32
    %c0_i32_0 = arith.constant 0 : i32
    return %arg0, %c0_i32, %arg1 : i32, i32, i32
  }
  func.func @transform_1(%arg0: i32, %arg1: i32) -> (i32, i32) {
    %c0_i32 = arith.constant 0 : i32
    %c0_i32_0 = arith.constant 0 : i32
    %c0_i32_1 = arith.constant 0 : i32
    return %c0_i32, %c0_i32_0 : i32, i32
  }
  func.func @transform_2(%arg0: i32, %arg1: i32) -> (i32, i32) {
    %c0_i32 = arith.constant 0 : i32
    %c0_i32_0 = arith.constant 0 : i32
    %c0_i32_1 = arith.constant 0 : i32
    return %c0_i32, %c0_i32_0 : i32, i32
  }
  func.func @transform_3(%arg0: i32, %arg1: i32) -> (i32, i32, i32) {
    %c0_i32 = arith.constant 0 : i32
    %c0_i32_0 = arith.constant 0 : i32
    %c0_i32_1 = arith.constant 0 : i32
    return %arg0, %c0_i32, %c0_i32_0 : i32, i32, i32
  }
}

</mosaic_0001>

<llo_original>
// kernel: tpu_custom_call.1
$region0: #{tpu_custom_call.1}
  #allocation0 [shape = 'u32[]', space=smem, size = 0x4, offset = 0x4, fixed_abs, tag = 'smem constant byte address 0x4 - core index']
  #allocation1 [shape = 'u32[144,128]{1,0:T(1,128)}', space=vmem, size = 0x12000, scoped, tag = 'internal scratch']
  #allocation2 [shape = 'f32[1,32,128]{2,1,0:T(8,128)}', space=vmem, size = 0x4000, scoped, tag = 'scratch operand']
  %s0 = inlined_call_operand.hbm [shape: f32[2,32,256], index: 0, kind: input, shape index: {}]
  %s1 = inlined_call_operand.hbm [shape: f32[64,256], index: 1, kind: input, shape index: {}]
  %s2 = inlined_call_operand.hbm [shape: f32[7,256], index: 2, kind: input, shape index: {}]
  %s3 = inlined_call_operand.hbm [shape: f32[2,1,64], index: 3, kind: output, shape index: {}]
  %s4 = sld [smem:[#allocation0]]
  $region65: #{tpu_custom_call.1} parent=0
    _
  %s6 = ssub.s32 1, %s4
  %s7 = scalar_select 0, %s6, %s4
  $region1: #{tpu_custom_call.1} parent=0
    #allocation3 [shape = 'u8[32768]{0}', space=vmem, size = 0x8000, scoped, tag = 'input window, operand 0']
    #allocation4 [shape = 's32[2]{0}', space=sflag, size = 0x8, scoped, tag = 'scoped memory for tpu_custom_call.1']
    #allocation5 [shape = 's32[2]{0}', space=sflag, size = 0x8, scoped, tag = 'scoped memory for tpu_custom_call.1']
    #allocation6 [shape = 'u8[65536]{0}', space=vmem, size = 0x10000, scoped, tag = 'input window, operand 1, single buffered']
    #allocation7 [shape = 's32[1]{0}', space=sflag, size = 0x4, scoped, tag = 'scoped memory for tpu_custom_call.1']
    #allocation8 [shape = 'u8[8192]{0}', space=vmem, size = 0x2000, scoped, tag = 'input window, operand 2, single buffered']
    #allocation9 [shape = 'u8[1024]{0}', space=vmem, size = 0x400, scoped, tag = 'output window, operand 0']
    %8 = vsyncpa [#allocation4], 0
    %s9 = scalar_lea.sflag [#allocation4], 1
    %10 = vsyncpa %s9, 0
    %11 = vsyncpa [#allocation7], 0
    %12 = vsyncpa [#allocation5], 0
    %s13 = scalar_lea.sflag [#allocation5], 1
    %14 = vsyncpa %s13, 0
    loop: start=0, step=1, limit=6
    $region2: #{tpu_custom_call.1} parent=1 // loop_pre_header
      _
    $region3: #{tpu_custom_call.1} parent=1 // loop_header
      %s16 = sphi 0, %s20
      %p17 = scmp.ge.s32.totalorder %s16, 6
      %s23 = sphi 0, %s35
      %s24 = sphi 0, %s31
      %s25 = sphi 0, %s23
      %s26 = sphi 0, %s24
      %s27 = sphi 0, %s25
      %s28 = sphi 0, %s26
      %s40 = sphi 0, %s42
      %s43 = sphi 0, %s40
      %s44 = sphi 0, %s43
      %s60 = sphi 0, %s44
      %s64 = sphi 0, %s64
      %s66 = sphi 0, %s64
      %s67 = sphi 0, %s66
      %s81 = sphi 0, %s67
      %s85 = sphi 0, %s85
      %s87 = sphi 0, %s85
      %s88 = sphi 0, %s87
      %s102 = sphi 0, %s88
      %s108 = sphi 0, %s110
      %s111 = sphi 0, %s108
      %s112 = sphi 0, %s111
      %s128 = sphi 0, %s112
    $region4: #{tpu_custom_call.1} parent=1 // loop_header_branch
      %19 = sbr.rel (%p17) target = $region8
    $region5: #{tpu_custom_call.1} parent=1 // loop_body
      %s21 = ssub.s32 %s16, 1
      %s22 = ssub.s32 %s16, 2
      %s29 = sadd.s32 1, %s24
      %p30 = scmp.ge.s32.totalorder %s29, 2
      %s31 = scalar_select %p30, 0, %s29
      %s32 = sadd.s32 1, %s23
      %s33 = scalar_select %p30, %s32, %s23
      %p34 = scmp.ge.s32.totalorder %s33, 2
      %s35 = scalar_select %p34, 0, %s33
      %s36 = ssub.s32 %s23, %s35
      %s37 = ssub.s32 %s24, %s31
      %s38 = sor.u32 %s36, %s37
      %p39 = scmp.eq.s32.totalorder %s38, 0
      %s41 = sadd.s32 %s40, 1
      %s42 = scalar_select %p39, %s40, %s41
      %p45 = pneg %p39
      %p46 = scmp.eq.s32.totalorder %s16, 3
      %p47 = por %p45, %p46
      %p48 = scmp.ne.s32.totalorder %s40, %s43
      %p49 = scmp.eq.s32.totalorder %s16, 0
      %p50 = por %p48, %p49
      %p51 = scmp.ne.s32.totalorder %s40, %s43
      %p52 = scmp.eq.s32.totalorder %s21, 3
      %p53 = por %p51, %p52
      %p54 = scmp.ne.s32.totalorder %s43, %s44
      %p55 = scmp.eq.s32.totalorder %s21, 0
      %p56 = por %p54, %p55
      %p57 = scmp.ne.s32.totalorder %s43, %s44
      %p58 = scmp.eq.s32.totalorder %s22, 3
      %p59 = por %p57, %p58
      %p61 = scmp.ne.s32.totalorder %s44, %s60
      %p62 = scmp.eq.s32.totalorder %s22, 0
      %p63 = por %p61, %p62
      %s65 = sadd.s32 %s64, 1
      %p68 = scmp.eq.s32.totalorder %s16, 3
      %p69 = scmp.ne.s32.totalorder %s64, %s66
      %p70 = scmp.eq.s32.totalorder %s16, 0
      %p71 = por %p69, %p70
      %p72 = scmp.ne.s32.totalorder %s64, %s66
      %p73 = scmp.eq.s32.totalorder %s21, 3
      %p74 = por %p72, %p73
      %p75 = scmp.ne.s32.totalorder %s66, %s67
      %p76 = scmp.eq.s32.totalorder %s21, 0
      %p77 = por %p75, %p76
      %p78 = scmp.ne.s32.totalorder %s66, %s67
      %p79 = scmp.eq.s32.totalorder %s22, 3
      %p80 = por %p78, %p79
      %p82 = scmp.ne.s32.totalorder %s67, %s81
      %p83 = scmp.eq.s32.totalorder %s22, 0
      %p84 = por %p82, %p83
      %s86 = sadd.s32 %s85, 1
      %p89 = scmp.eq.s32.totalorder %s16, 3
      %p90 = scmp.ne.s32.totalorder %s85, %s87
      %p91 = scmp.eq.s32.totalorder %s16, 0
      %p92 = por %p90, %p91
      %p93 = scmp.ne.s32.totalorder %s85, %s87
      %p94 = scmp.eq.s32.totalorder %s21, 3
      %p95 = por %p93, %p94
      %p96 = scmp.ne.s32.totalorder %s87, %s88
      %p97 = scmp.eq.s32.totalorder %s21, 0
      %p98 = por %p96, %p97
      %p99 = scmp.ne.s32.totalorder %s87, %s88
      %p100 = scmp.eq.s32.totalorder %s22, 3
      %p101 = por %p99, %p100
      %p103 = scmp.ne.s32.totalorder %s88, %s102
      %p104 = scmp.eq.s32.totalorder %s22, 0
      %p105 = por %p103, %p104
      %s106 = ssub.s32 %s23, %s35
      %p107 = scmp.eq.s32.totalorder %s106, 0
      %s109 = sadd.s32 %s108, 1
      %s110 = scalar_select %p107, %s108, %s109
      %p113 = pneg %p107
      %p114 = scmp.eq.s32.totalorder %s16, 3
      %p115 = por %p113, %p114
      %p116 = scmp.ne.s32.totalorder %s108, %s111
      %p117 = scmp.eq.s32.totalorder %s16, 0
      %p118 = por %p116, %p117
      %p119 = scmp.ne.s32.totalorder %s108, %s111
      %p120 = scmp.eq.s32.totalorder %s21, 3
      %p121 = por %p119, %p120
      %p122 = scmp.ne.s32.totalorder %s111, %s112
      %p123 = scmp.eq.s32.totalorder %s21, 0
      %p124 = por %p122, %p123
      %p125 = scmp.ne.s32.totalorder %s111, %s112
      %p126 = scmp.eq.s32.totalorder %s22, 3
      %p127 = por %p125, %p126
      %p129 = scmp.ne.s32.totalorder %s112, %s128
      %p130 = scmp.eq.s32.totalorder %s22, 0
      %p131 = por %p129, %p130
      %p132 = scmp.le.s32.totalorder 1, %s16
      %p133 = scmp.lt.s32.totalorder %s16, 5
      %p134 = pnand %p132, %p133
      %p135 = pneg %p134
      // Predicated region
      $region9: #{tpu_custom_call.1} parent=5 // pred_check
        _
      $region10: #{tpu_custom_call.1} parent=5 // pred_check_branch
        %137 = sbr.rel (%p134) target = $region12
      $region11: #{tpu_custom_call.1} parent=5 // pred_region
        %s138 = ssub.s32 %s16, 1
        // Predicated region
        $region13: #{tpu_custom_call.1} parent=11 // pred_check
          %p139 = pneg %p77
        $region14: #{tpu_custom_call.1} parent=11 // pred_check_branch
          %141 = sbr.rel (%p139) target = $region16
        $region15: #{tpu_custom_call.1} parent=11 // pred_region
          %s143 = ssub.s32 2048, 2048
          %144 = vsyncadd [#allocation7], %s143
          %s145 = sshll.u32 [#allocation6], 4
          %s146 = int_to_ptr.vmem [resolvable:$true] %s145
          %151 = dma.hbm_to_vmem [thread:$0]  %s1, 2048, %s146, [#allocation7], 256, 256, 16
        $region16: #{tpu_custom_call.1} parent=11 // pred_fallthru
          _
        // Predicated region
        $region17: #{tpu_custom_call.1} parent=11 // pred_check
          %p152 = pneg %p98
        $region18: #{tpu_custom_call.1} parent=11 // pred_check_branch
          %154 = sbr.rel (%p152) target = $region20
        $region19: #{tpu_custom_call.1} parent=11 // pred_region
          %s156 = ssub.s32 256, 256
          %157 = vsyncadd [#allocation7], %s156
          %s159 = sshll.u32 [#allocation8], 4
          %s160 = int_to_ptr.vmem [resolvable:$true] %s159
          %162 = dma.hbm_to_vmem [thread:$0]  %s2, 256, %s160, [#allocation7]
        $region20: #{tpu_custom_call.1} parent=11 // pred_fallthru
          _
      $region12: #{tpu_custom_call.1} parent=5 // pred_fallthru
        _
      %p163 = scmp.lt.s32.totalorder %s16, 4
      // Predicated region
      $region21: #{tpu_custom_call.1} parent=5 // pred_check
        %p164 = pneg %p163
      $region22: #{tpu_custom_call.1} parent=5 // pred_check_branch
        %166 = sbr.rel (%p164) target = $region24
      $region23: #{tpu_custom_call.1} parent=5 // pred_region
        // Predicated region
        $region25: #{tpu_custom_call.1} parent=23 // pred_check
          %p167 = pneg %p50
        $region26: #{tpu_custom_call.1} parent=23 // pred_check_branch
          %169 = sbr.rel (%p167) target = $region28
        $region27: #{tpu_custom_call.1} parent=23 // pred_region
          %s170 = sand.u32 %s40, 1
          %s171 = scalar_lea.sflag [#allocation4], %s170
          %s172 = sand.u32 %s40, 1
          %s173 = smul.addr %s172, 32
          %s174 = scalar_lea.vmem [#allocation3], %s173
          %s176 = ssub.s32 512, 512
          %177 = vsyncadd %s171, %s176
          %s178 = smul.addr %s23, 8
          %s179 = sadd.s32 %s24, %s178
          %s180 = smul.addr %s179, 128
          %s181 = scalar_lea.hbm %s0, %s180
          %s182 = sshll.u32 %s174, 4
          %s183 = int_to_ptr.vmem [resolvable:$true] %s182
          %188 = dma.hbm_to_vmem [thread:$0]  %s181, 512, %s183, %s171, 256, 128, 8
        $region28: #{tpu_custom_call.1} parent=23 // pred_fallthru
          _
      $region24: #{tpu_custom_call.1} parent=5 // pred_fallthru
        _
      %p189 = scmp.le.s32.totalorder 1, %s16
      %p190 = scmp.lt.s32.totalorder %s16, 5
      %p191 = pnand %p189, %p190
      %p192 = pneg %p191
      // Predicated region
      $region29: #{tpu_custom_call.1} parent=5 // pred_check
        _
      $region30: #{tpu_custom_call.1} parent=5 // pred_check_branch
        %194 = sbr.rel (%p191) target = $region32
      $region31: #{tpu_custom_call.1} parent=5 // pred_region
        %s195 = ssub.s32 %s16, 1
        %s196 = sand.u32 %s43, 1
        %s197 = scalar_lea.sflag [#allocation4], %s196
        %s198 = sand.u32 %s43, 1
        %s199 = smul.addr %s198, 32
        %s200 = scalar_lea.vmem [#allocation3], %s199
        // Predicated region
        $region33: #{tpu_custom_call.1} parent=31 // pred_check
          %p201 = pneg %p56
        $region34: #{tpu_custom_call.1} parent=31 // pred_check_branch
          %203 = sbr.rel (%p201) target = $region36
        $region35: #{tpu_custom_call.1} parent=31 // pred_region
          %204 = dma.done %s197, 512
        $region36: #{tpu_custom_call.1} parent=31 // pred_fallthru
          _
        // Predicated region
        $region37: #{tpu_custom_call.1} parent=31 // pred_check
          %p205 = pneg %p77
        $region38: #{tpu_custom_call.1} parent=31 // pred_check_branch
          %207 = sbr.rel (%p205) target = $region40
        $region39: #{tpu_custom_call.1} parent=31 // pred_region
          %208 = dma.done [#allocation7], 2048
        $region40: #{tpu_custom_call.1} parent=31 // pred_fallthru
          _
        // Predicated region
        $region41: #{tpu_custom_call.1} parent=31 // pred_check
          %p209 = pneg %p98
        $region42: #{tpu_custom_call.1} parent=31 // pred_check_branch
          %211 = sbr.rel (%p209) target = $region44
        $region43: #{tpu_custom_call.1} parent=31 // pred_region
          %212 = dma.done [#allocation7], 256
        $region44: #{tpu_custom_call.1} parent=31 // pred_fallthru
          _
        %s213 = sand.u32 %s43, 1
        %s214 = scalar_lea.sflag [#allocation4], %s213
        %s215 = sand.u32 %s43, 1
        %s216 = smul.addr %s215, 32
        %s217 = scalar_lea.vmem [#allocation3], %s216
        %p218 = pneg %p56
        %p219 = pneg %p53
        %p220 = pneg %p77
        %p221 = pneg %p74
        %p222 = pneg %p98
        %p223 = pneg %p95
        %p224 = pneg %p124
        %p225 = pneg %p121
        %s226 = sand.u32 %s111, 1
        %s227 = scalar_lea.sflag [#allocation5], %s226
        %s228 = sand.u32 %s111, 1
        %s229 = scalar_lea.vmem [#allocation9], %s228
        %p230 = scmp.eq.s32.totalorder %s26, 0
        // Predicated region
        $region45: #{tpu_custom_call.1} parent=31 // pred_check
          %p231 = pneg %p230
        $region46: #{tpu_custom_call.1} parent=31 // pred_check_branch
          %233 = sbr.rel (%p231) target = $region48
        $region47: #{tpu_custom_call.1} parent=31 // pred_region
          %234 = vst [vmem:[#allocation2] sm:$0xff] 0.0
          %235 = vst [vmem:[#allocation2 + $0x8] sm:$0xff] 0.0
          %236 = vst [vmem:[#allocation2 + $0x10] sm:$0xff] 0.0
          %237 = vst [vmem:[#allocation2 + $0x18] sm:$0xff] 0.0
        $region48: #{tpu_custom_call.1} parent=31 // pred_fallthru
          _
        %v238 = vld [vmem:[%s200] sm:$0xff]
        %v239 = vld [vmem:[%s200 + $0x8] sm:$0xff]
        %v240 = vld [vmem:[%s200 + $0x10] sm:$0xff]
        %v241 = vld [vmem:[%s200 + $0x18] sm:$0xff]
        %v242 = vld [vmem:[#allocation2] sm:$0xff]
        %v243 = vld [vmem:[#allocation2 + $0x8] sm:$0xff]
        %v244 = vld [vmem:[#allocation2 + $0x10] sm:$0xff]
        %v245 = vld [vmem:[#allocation2 + $0x18] sm:$0xff]
        %v246 = vadd.f32 %v242, %v238
        %v247 = vadd.f32 %v243, %v239
        %v248 = vadd.f32 %v244, %v240
        %v249 = vadd.f32 %v245, %v241
        %250 = vst [vmem:[#allocation2] sm:$0xff] %v246
        %251 = vst [vmem:[#allocation2 + $0x8] sm:$0xff] %v247
        %252 = vst [vmem:[#allocation2 + $0x10] sm:$0xff] %v248
        %253 = vst [vmem:[#allocation2 + $0x18] sm:$0xff] %v249
        %p254 = scmp.eq.s32.totalorder %s26, 1
        // Predicated region
        $region49: #{tpu_custom_call.1} parent=31 // pred_check
          %p255 = pneg %p254
        $region50: #{tpu_custom_call.1} parent=31 // pred_check_branch
          %257 = sbr.rel (%p255) target = $region52
        $region51: #{tpu_custom_call.1} parent=31 // pred_region
          %v258 = vld [vmem:[#allocation8] sm:$0x7f]
          %v259 = vld [vmem:[#allocation8 + $0x8] sm:$0x7f]
          %v260 = vld [vmem:[#allocation6] sm:$0xff]
          %v261 = vld [vmem:[#allocation6 + $0x8] sm:$0xff]
          %v262 = vld [vmem:[#allocation6 + $0x10] sm:$0xff]
          %v263 = vld [vmem:[#allocation6 + $0x18] sm:$0xff]
          %v264 = vld [vmem:[#allocation6 + $0x20] sm:$0xff]
          %v265 = vld [vmem:[#allocation6 + $0x28] sm:$0xff]
          %v266 = vld [vmem:[#allocation6 + $0x30] sm:$0xff]
          %v267 = vld [vmem:[#allocation6 + $0x38] sm:$0xff]
          %v268 = vld [vmem:[#allocation6 + $0x40] sm:$0xff]
          %v269 = vld [vmem:[#allocation6 + $0x48] sm:$0xff]
          %v270 = vld [vmem:[#allocation6 + $0x50] sm:$0xff]
          %v271 = vld [vmem:[#allocation6 + $0x58] sm:$0xff]
          %v272 = vld [vmem:[#allocation6 + $0x60] sm:$0xff]
          %v273 = vld [vmem:[#allocation6 + $0x68] sm:$0xff]
          %v274 = vld [vmem:[#allocation6 + $0x70] sm:$0xff]
          %v275 = vld [vmem:[#allocation6 + $0x78] sm:$0xff]
          %v276 = vld [vmem:[#allocation2] sm:$0xff]
          %v277 = vld [vmem:[#allocation2 + $0x8] sm:$0xff]
          %v278 = vld [vmem:[#allocation2 + $0x10] sm:$0xff]
          %v279 = vld [vmem:[#allocation2 + $0x18] sm:$0xff]
          %280 = vadd.xlane.f32.xlu0 %v276
          %v281 = vpop.xlane.xlu0 %280
          %282 = vadd.xlane.f32.xlu0 %v277
          %v283 = vpop.xlane.xlu0 %282
          %284 = vadd.xlane.f32.xlu0 %v278
          %v285 = vpop.xlane.xlu0 %284
          %286 = vadd.xlane.f32.xlu0 %v279
          %v287 = vpop.xlane.xlu0 %286
          %v288 = vmul.f32 %v281, 0.00390625
          %v289 = vmul.f32 %v283, 0.00390625
          %v290 = vmul.f32 %v285, 0.00390625
          %v291 = vmul.f32 %v287, 0.00390625
          %v297 = vunpack.c.l.s4 839922192
          %v298 = vunpack.c.0.s8 %v297
          %v299 = vlaneseq
          %v300 = vshrl.u32 %v299, 7
          %v301 = vsub.s32 %v298, %v300
          %v302 = vrot.slane %v288, %v301
          %v304 = vunpack.c.l.s4 1985246804
          %v305 = vunpack.c.0.s8 %v304
          %v306 = vlaneseq
          %v307 = vshrl.u32 %v306, 7
          %v308 = vsub.s32 %v305, %v307
          %v309 = vrot.slane %v288, %v308
          %v311 = vunpack.c.l.s4 839922192
          %v312 = vunpack.c.0.s8 %v311
          %v313 = vlaneseq
          %v314 = vshrl.u32 %v313, 7
          %v315 = vsub.s32 %v312, %v314
          %v316 = vrot.slane %v289, %v315
          %v318 = vunpack.c.l.s4 1985246804
          %v319 = vunpack.c.0.s8 %v318
          %v320 = vlaneseq
          %v321 = vshrl.u32 %v320, 7
          %v322 = vsub.s32 %v319, %v321
          %v323 = vrot.slane %v289, %v322
          %v325 = vunpack.c.l.s4 839922192
          %v326 = vunpack.c.0.s8 %v325
          %v327 = vlaneseq
          %v328 = vshrl.u32 %v327, 7
          %v329 = vsub.s32 %v326, %v328
          %v330 = vrot.slane %v290, %v329
          %v332 = vunpack.c.l.s4 1985246804
          %v333 = vunpack.c.0.s8 %v332
          %v334 = vlaneseq
          %v335 = vshrl.u32 %v334, 7
          %v336 = vsub.s32 %v333, %v335
          %v337 = vrot.slane %v290, %v336
          %v339 = vunpack.c.l.s4 839922192
          %v340 = vunpack.c.0.s8 %v339
          %v341 = vlaneseq
          %v342 = vshrl.u32 %v341, 7
          %v343 = vsub.s32 %v340, %v342
          %v344 = vrot.slane %v291, %v343
          %v346 = vunpack.c.l.s4 1985246804
          %v347 = vunpack.c.0.s8 %v346
          %v348 = vlaneseq
          %v349 = vshrl.u32 %v348, 7
          %v350 = vsub.s32 %v347, %v349
          %v351 = vrot.slane %v291, %v350
          %v352 = vlaneseq
          %v353 = vshrl.u32 %v352, 7
          %v354 = vsub.s32 0, %v353
          %v355 = vrot.slane %v258, %v354
          %356 = vset.pattern.permute.xlu0 0
          %357 = vperm.xlu0 %356, %v302
          %v358 = vpop.permute.xlu0 %357
          %359 = vset.pattern.permute.xlu0 0
          %360 = vperm.xlu0 %359, %v309
          %v361 = vpop.permute.xlu0 %360
          %362 = vset.pattern.permute.xlu0 0
          %363 = vperm.xlu0 %362, %v316
          %v364 = vpop.permute.xlu0 %363
          %365 = vset.pattern.permute.xlu0 0
          %366 = vperm.xlu0 %365, %v323
          %v367 = vpop.permute.xlu0 %366
          %368 = vset.pattern.permute.xlu0 0
          %369 = vperm.xlu0 %368, %v330
          %v370 = vpop.permute.xlu0 %369
          %371 = vset.pattern.permute.xlu0 0
          %372 = vperm.xlu0 %371, %v337
          %v373 = vpop.permute.xlu0 %372
          %374 = vset.pattern.permute.xlu0 0
          %375 = vperm.xlu0 %374, %v344
          %v376 = vpop.permute.xlu0 %375
          %377 = vset.pattern.permute.xlu0 0
          %378 = vperm.xlu0 %377, %v351
          %v379 = vpop.permute.xlu0 %378
          %v380 = vlaneseq
          %v381 = vand.u32 %v380, 127
          %v382 = vlaneseq
          %v383 = vshrl.u32 %v382, 7
          %v384 = vsub.s32 %v381, %v383
          %v385 = vrot.slane %v358, %v384
          %v386 = vlaneseq
          %v387 = vshrl.u32 %v386, 7
          %v388 = vsub.s32 %v381, %v387
          %v389 = vrot.slane %v361, %v388
          %v390 = vlaneseq
          %v391 = vshrl.u32 %v390, 7
          %v392 = vsub.s32 %v381, %v391
          %v393 = vrot.slane %v364, %v392
          %v394 = vlaneseq
          %v395 = vshrl.u32 %v394, 7
          %v396 = vsub.s32 %v381, %v395
          %v397 = vrot.slane %v367, %v396
          %v398 = vlaneseq
          %v399 = vshrl.u32 %v398, 7
          %v400 = vsub.s32 %v381, %v399
          %v401 = vrot.slane %v370, %v400
          %v402 = vlaneseq
          %v403 = vshrl.u32 %v402, 7
          %v404 = vsub.s32 %v381, %v403
          %v405 = vrot.slane %v373, %v404
          %v406 = vlaneseq
          %v407 = vshrl.u32 %v406, 7
          %v408 = vsub.s32 %v381, %v407
          %v409 = vrot.slane %v376, %v408
          %v410 = vlaneseq
          %v411 = vshrl.u32 %v410, 7
          %v412 = vsub.s32 %v381, %v411
          %v413 = vrot.slane %v379, %v412
          %vm414 = vcmask 1041409
          %v415 = vsel %vm414, %v389, %v385
          %vm416 = vcmask 1042434
          %v417 = vsel %vm416, %v393, %v415
          %vm418 = vcmask 1043459
          %v419 = vsel %vm418, %v397, %v417
          %vm420 = vcmask 1044484
          %v421 = vsel %vm420, %v401, %v419
          %vm422 = vcmask 1045509
          %v423 = vsel %vm422, %v405, %v421
          %vm424 = vcmask 1046534
          %v425 = vsel %vm424, %v409, %v423
          %vm426 = vcmask 1047559
          %v427 = vsel %vm426, %v413, %v425
          %v429 = vrot.slane %v258, 3
          %vm430 = vcmask 31744
          %v431 = vsel %vm430, %v427, 0
          %vm433 = vcmask 1043456
          %v434 = vsel %vm433, %v429, 0
          %436 = vmatprep.subr.mxu0 0.0
          %437 = vmatpush1.msra.mxu0 %v434
          %438 = vmatprep.subr.mxu0 0.0
          %439 = vmatpush1.msra.mxu0 0.0
          %440 = vmatprep.subr.mxu0 0.0
          %441 = vmatpush1.msra.mxu0 0.0
          %442 = vmatprep.subr.mxu0 0.0
          %443 = vmatpush1.msra.mxu0 0.0
          %444 = vmatprep.subr.mxu0 0.0
          %445 = vmatpush1.msra.mxu0 0.0
          %446 = vmatprep.subr.mxu0 0.0
          %447 = vmatpush1.msra.mxu0 0.0
          %448 = vmatprep.subr.mxu0 0.0
          %449 = vmatpush1.msra.mxu0 0.0
          %450 = vmatprep.subr.mxu0 0.0
          %451 = vmatpush1.msra.mxu0 0.0
          %452 = vmatprep.subr.mxu0 0.0
          %453 = vmatpush1.msra.mxu0 0.0
          %454 = vmatprep.subr.mxu0 0.0
          %455 = vmatpush1.msra.mxu0 0.0
          %456 = vmatprep.subr.mxu0 0.0
          %457 = vmatpush1.msra.mxu0 0.0
          %458 = vmatprep.subr.mxu0 0.0
          %459 = vmatpush1.msra.mxu0 0.0
          %460 = vmatprep.subr.mxu0 0.0
          %461 = vmatpush1.msra.mxu0 0.0
          %462 = vmatprep.subr.mxu0 0.0
          %463 = vmatpush1.msra.mxu0 0.0
          %464 = vmatprep.subr.mxu0 0.0
          %465 = vmatpush1.msra.mxu0 0.0
          %466 = vmatprep.subr.mxu0 0.0
          %467 = vmatpush1.msra.mxu0 0.0
          %468 = vmatprep.subr.mxu0 0.0
          %469 = vmatpush1.msra.mxu0 0.0
          %470 = vmatprep.subr.mxu0 0.0
          %471 = vmatpush1.msra.mxu0 0.0
          %472 = vmatprep.subr.mxu0 0.0
          %473 = vmatpush1.msra.mxu0 0.0
          %474 = vmatprep.subr.mxu0 0.0
          %475 = vmatpush1.msra.mxu0 0.0
          %476 = vmatprep.subr.mxu0 0.0
          %477 = vmatpush1.msra.mxu0 0.0
          %478 = vmatprep.subr.mxu0 0.0
          %479 = vmatpush1.msra.mxu0 0.0
          %480 = vmatprep.subr.mxu0 0.0
          %481 = vmatpush1.msra.mxu0 0.0
          %482 = vmatprep.subr.mxu0 0.0
          %483 = vmatpush1.msra.mxu0 0.0
          %484 = vmatprep.subr.mxu0 0.0
          %485 = vmatpush1.msra.mxu0 0.0
          %486 = vmatprep.subr.mxu0 0.0
          %487 = vmatpush1.msra.mxu0 0.0
          %488 = vmatprep.subr.mxu0 0.0
          %489 = vmatpush1.msra.mxu0 0.0
          %490 = vmatprep.subr.mxu0 0.0
          %491 = vmatpush1.msra.mxu0 0.0
          %492 = vmatprep.subr.mxu0 0.0
          %493 = vmatpush1.msra.mxu0 0.0
          %494 = vmatprep.subr.mxu0 0.0
          %495 = vmatpush1.msra.mxu0 0.0
          %496 = vmatprep.subr.mxu0 0.0
          %497 = vmatpush1.msra.mxu0 0.0
          %498 = vmatprep.subr.mxu0 0.0
          %499 = vmatpush1.msra.mxu0 0.0
          %500 = vmatprep.mubr.f32.mxu0 0.0
          %501 = vmatmul.mubr.f32.gmra.mrb[0].mxu0 %v431
          %v502 = vpop.f32.mrb[0].mxu0
          %v503 = vadd.f32 %v355, %v502
          %v504 = vpop.f32.mrb[0].mxu0
          %505 = vdwg.mxu0
          %v506 = vlaneseq
          %v507 = vshrl.u32 %v506, 7
          %v508 = vsub.s32 1, %v507
          %v509 = vrot.slane %v258, %v508
          %v510 = vlaneseq
          %v511 = vshrl.u32 %v510, 7
          %v512 = vsub.s32 1, %v511
          %v513 = vrot.slane %v259, %v512
          %vm514 = vcmask 523264
          %v516 = vsel %vm514, %v503, 0
          %518 = vmatprep.subr.mxu0 %v261
          %519 = vmatpush1.msra.mxu0 %v260
          %520 = vmatprep.subr.mxu0 %v263
          %521 = vmatpush1.msra.mxu0 %v262
          %522 = vmatprep.subr.mxu0 %v265
          %523 = vmatpush1.msra.mxu0 %v264
          %524 = vmatprep.subr.mxu0 %v267
          %525 = vmatpush1.msra.mxu0 %v266
          %526 = vmatprep.subr.mxu0 %v269
          %527 = vmatpush1.msra.mxu0 %v268
          %528 = vmatprep.subr.mxu0 %v271
          %529 = vmatpush1.msra.mxu0 %v270
          %530 = vmatprep.subr.mxu0 %v273
          %531 = vmatpush1.msra.mxu0 %v272
          %532 = vmatprep.subr.mxu0 %v275
          %533 = vmatpush1.msra.mxu0 %v274
          %534 = vmatprep.subr.mxu0 0.0
          %535 = vmatpush1.msra.mxu0 0.0
          %536 = vmatprep.subr.mxu0 0.0
          %537 = vmatpush1.msra.mxu0 0.0
          %538 = vmatprep.subr.mxu0 0.0
          %539 = vmatpush1.msra.mxu0 0.0
          %540 = vmatprep.subr.mxu0 0.0
          %541 = vmatpush1.msra.mxu0 0.0
          %542 = vmatprep.subr.mxu0 0.0
          %543 = vmatpush1.msra.mxu0 0.0
          %544 = vmatprep.subr.mxu0 0.0
          %545 = vmatpush1.msra.mxu0 0.0
          %546 = vmatprep.subr.mxu0 0.0
          %547 = vmatpush1.msra.mxu0 0.0
          %548 = vmatprep.subr.mxu0 0.0
          %549 = vmatpush1.msra.mxu0 0.0
          %550 = vmatprep.subr.mxu0 0.0
          %551 = vmatpush1.msra.mxu0 0.0
          %552 = vmatprep.subr.mxu0 0.0
          %553 = vmatpush1.msra.mxu0 0.0
          %554 = vmatprep.subr.mxu0 0.0
          %555 = vmatpush1.msra.mxu0 0.0
          %556 = vmatprep.subr.mxu0 0.0
          %557 = vmatpush1.msra.mxu0 0.0
          %558 = vmatprep.subr.mxu0 0.0
          %559 = vmatpush1.msra.mxu0 0.0
          %560 = vmatprep.subr.mxu0 0.0
          %561 = vmatpush1.msra.mxu0 0.0
          %562 = vmatprep.subr.mxu0 0.0
          %563 = vmatpush1.msra.mxu0 0.0
          %564 = vmatprep.subr.mxu0 0.0
          %565 = vmatpush1.msra.mxu0 0.0
          %566 = vmatprep.subr.mxu0 0.0
          %567 = vmatpush1.msra.mxu0 0.0
          %568 = vmatprep.subr.mxu0 0.0
          %569 = vmatpush1.msra.mxu0 0.0
          %570 = vmatprep.subr.mxu0 0.0
          %571 = vmatpush1.msra.mxu0 0.0
          %572 = vmatprep.subr.mxu0 0.0
          %573 = vmatpush1.msra.mxu0 0.0
          %574 = vmatprep.subr.mxu0 0.0
          %575 = vmatpush1.msra.mxu0 0.0
          %576 = vmatprep.subr.mxu0 0.0
          %577 = vmatpush1.msra.mxu0 0.0
          %578 = vmatprep.subr.mxu0 0.0
          %579 = vmatpush1.msra.mxu0 0.0
          %580 = vmatprep.subr.mxu0 0.0
          %581 = vmatpush1.msra.mxu0 0.0
          %582 = vmatprep.mubr.f32.mxu0 0.0
          %583 = vmatmul.mubr.f32.gmra.mrb[0].mxu0 %v516
          %v584 = vpop.f32.mrb[0].mxu0
          %v585 = vadd.f32 %v509, %v584
          %v586 = vpop.f32.mrb[0].mxu0
          %v587 = vadd.f32 %v513, %v586
          %588 = vdwg.mxu0
          %v589 = vmax.f32 %v585, 0.0
          %v590 = vmax.f32 %v587, 0.0
          %v591 = vlaneseq
          %v592 = vshrl.u32 %v591, 7
          %v593 = vsub.s32 2, %v592
          %v594 = vrot.slane %v258, %v593
          %v595 = vlaneseq
          %v596 = vshrl.u32 %v595, 7
          %v597 = vsub.s32 2, %v596
          %v598 = vrot.slane %v259, %v597
          %v599 = vmul.f32 %v589, %v594
          %v600 = vmul.f32 %v590, %v598
          %v601 = vadd.f32 %v599, %v600
          %602 = vadd.xlane.f32.xlu0 %v601
          %v603 = vpop.xlane.xlu0 %602
          %v604 = vrot.slane %v603, 4
          %v605 = vmax.f32 %v603, %v604
          %v606 = vrot.slane %v605, 2
          %v607 = vmax.f32 %v605, %v606
          %v608 = vrot.slane %v607, 1
          %v609 = vmax.f32 %v607, %v608
          %v610 = vsub.f32 %v603, %v609
          %v611 = vmul.f32 %v610, 1.442695
          %v612 = vpow.pop %v611
          %v613 = vrot.slane %v612, 4
          %v614 = vadd.f32 %v612, %v613
          %v615 = vrot.slane %v614, 2
          %v616 = vadd.f32 %v614, %v615
          %v617 = vrot.slane %v616, 1
          %v618 = vadd.f32 %v616, %v617
          %v619 = vrcp.pop %v618
          %v620 = vmul.f32 %v612, %v619
          %v621 = vmul.f32 %v503, %v620
          %v622 = vsel %vm514, %v621, 0.0
          %v623 = vrot.slane %v622, 4
          %v624 = vadd.f32 %v622, %v623
          %v625 = vrot.slane %v624, 2
          %v626 = vadd.f32 %v624, %v625
          %v627 = vrot.slane %v626, 1
          %v628 = vadd.f32 %v626, %v627
          %vm629 = vcmask 516096
          %630 = vst.msk [vmem:[%s229] sm:$0x1] %vm629, %v628
        $region52: #{tpu_custom_call.1} parent=31 // pred_fallthru
          _
        %s631 = sand.u32 %s111, 1
        %s632 = scalar_lea.sflag [#allocation5], %s631
        %s633 = sand.u32 %s111, 1
        %s634 = scalar_lea.vmem [#allocation9], %s633
        // Predicated region
        $region53: #{tpu_custom_call.1} parent=31 // pred_check
          %p635 = pneg %p121
        $region54: #{tpu_custom_call.1} parent=31 // pred_check_branch
          %637 = sbr.rel (%p635) target = $region56
        $region55: #{tpu_custom_call.1} parent=31 // pred_region
          %s639 = ssub.s32 16, 16
          %640 = vsyncadd %s632, %s639
          %s641 = smul.addr %s25, 16
          %s642 = scalar_lea.hbm %s3, %s641
          %s644 = sshll.u32 %s634, 4
          %s645 = int_to_ptr.vmem [resolvable:$true] %s644
          %647 = dma.vmem_to_hbm [thread:$0]  %s645, 16, %s642, %s632
        $region56: #{tpu_custom_call.1} parent=31 // pred_fallthru
          _
      $region32: #{tpu_custom_call.1} parent=5 // pred_fallthru
        _
      %p648 = scmp.le.s32.totalorder 2, %s16
      // Predicated region
      $region57: #{tpu_custom_call.1} parent=5 // pred_check
        %p649 = pneg %p648
      $region58: #{tpu_custom_call.1} parent=5 // pred_check_branch
        %651 = sbr.rel (%p649) target = $region60
      $region59: #{tpu_custom_call.1} parent=5 // pred_region
        %s652 = ssub.s32 %s16, 2
        // Predicated region
        $region61: #{tpu_custom_call.1} parent=59 // pred_check
          %p653 = pneg %p127
        $region62: #{tpu_custom_call.1} parent=59 // pred_check_branch
          %655 = sbr.rel (%p653) target = $region64
        $region63: #{tpu_custom_call.1} parent=59 // pred_region
          %s656 = sand.u32 %s112, 1
          %s657 = scalar_lea.sflag [#allocation5], %s656
          %s658 = sand.u32 %s112, 1
          %s659 = scalar_lea.vmem [#allocation9], %s658
          %660 = dma.done %s657, 16
        $region64: #{tpu_custom_call.1} parent=59 // pred_fallthru
          _
      $region60: #{tpu_custom_call.1} parent=5 // pred_fallthru
        _
    $region6: #{tpu_custom_call.1} parent=1 // loop_footer
      %s20 = sadd.s32 1, %s16
    $region7: #{tpu_custom_call.1} parent=1 // loop_footer_branch
      %15 = sbr.rel target = $region3
    $region8: #{tpu_custom_call.1} parent=1 // loop_exit
      _
    %661 = vsyncpa [#allocation4], 1
    %s662 = scalar_lea.sflag [#allocation4], 1
    %663 = vsyncpa %s662, 1
    %664 = vsyncpa [#allocation7], 1
    %665 = vsyncpa [#allocation5], 1
    %s666 = scalar_lea.sflag [#allocation5], 1
    %667 = vsyncpa %s666, 1

</llo_original>
